<compile_context>
chip_gen: v7x
topology: tpu7x:2x2x1
jax: 0.10.0
libtpu: 0.0.40
codegen_flags: <defaults>
</compile_context>

<pallas_src>
import jax
import jax.numpy as jnp
from jax.experimental import pallas as pl
from jax.experimental.pallas import tpu as pltpu


def _make_kernel(B, L, D, compute_dtype):
    # approx reciprocal only on the reduced-precision perf path; exact on f32.
    approx_recip = compute_dtype != jnp.float32

    def kernel(x_ref, w_ref, o_ref):
        # x_ref: (B, L, D); w_ref: (3, D, D) pre-transposed, Q-scaled, already
        # in compute_dtype; o_ref: (B, L, D)
        x2d = x_ref[...].reshape(B * L, D).astype(compute_dtype)

        # QKV projection: three MXU matmuls (no sub-lane-tile slicing of the
        # result), f32 accumulation.  1/sqrt(D) is folded into w_ref[0].
        q = jnp.dot(x2d, w_ref[0], preferred_element_type=jnp.float32)
        k = jnp.dot(x2d, w_ref[1], preferred_element_type=jnp.float32)
        v = jnp.dot(x2d, w_ref[2], preferred_element_type=jnp.float32)
        q = q.reshape(B, L, D).astype(compute_dtype)
        k = k.reshape(B, L, D).astype(compute_dtype)
        v = v.reshape(B, L, D).astype(compute_dtype)

        # scores = q @ k^T (batched), contracting last dims -> no XLU transpose.
        scores = jnp.einsum("bqd,bkd->bqk", q, k,
                            preferred_element_type=jnp.float32)  # (B,L,L) f32

        # Numerically-stable softmax numerator in f32; normalization deferred
        # until after the PV matmul (B*L*D multiplies instead of B*L*L, and no
        # (B, L, L) `attn` buffer).
        m = jnp.max(scores, axis=-1, keepdims=True)
        e = jnp.exp(scores - m)                                   # (B,L,L) f32
        denom = jnp.sum(e, axis=-1, keepdims=True)                # (B,L,1) f32

        out_unnorm = jnp.einsum("bqk,bkd->bqd",
                                e.astype(compute_dtype), v,
                                preferred_element_type=jnp.float32)  # (B,L,D)
        out = out_unnorm * pl.reciprocal(denom, approx=approx_recip)
        o_ref[...] = out.astype(o_ref.dtype)

    return kernel


def _vmem_budget_bytes():
    """Generation-aware VMEM budget: <= ~75% of physical per-core VMEM,
    capped at 100 MiB (v5e/v6e have 128 MiB, v7x only 64 MiB)."""
    cap = 0
    try:
        cap = int(getattr(pltpu.get_tpu_info(), "vmem_capacity_bytes", 0))
    except Exception:
        cap = 0
    if cap <= 0:
        cap = 64 * 1024 * 1024  # conservative default == v7x per-TC physical
    return int(min(0.75 * cap, 100 * 1024 * 1024))


def _vmem_estimate_bytes(B, L, D, x_bytes, out_bytes, cdt_bytes):
    """Per-step VMEM byte estimate, including compute-dtype cast copies."""
    f32 = 4
    rows = B * L
    est = 0
    est += 2 * rows * D * x_bytes            # double-buffered x blocks
    est += 2 * rows * D * out_bytes          # double-buffered out blocks
    est += 2 * 3 * D * D * cdt_bytes         # (double-buffered) weight stack
    est += rows * D * cdt_bytes              # x compute-dtype copy
    est += 3 * rows * D * (f32 + cdt_bytes)  # q/k/v f32 accs + compute copies
    est += 2 * B * L * L * f32               # scores + e (f32)
    est += B * L * L * cdt_bytes             # e compute-dtype copy
    est += 2 * rows * D * f32                # unnormalized / normalized out
    return est


def _pick_batch_block(N, L, D, budget, x_bytes, out_bytes, cdt_bytes):
    """Largest divisor of N whose VMEM estimate fits ~60% of the budget,
    preferring >= 2 grid steps (megacore / v7x 2-TC), ideally an even count."""
    divisors = [b for b in range(1, N + 1) if N % b == 0]
    fits = [b for b in divisors
            if _vmem_estimate_bytes(b, L, D, x_bytes, out_bytes, cdt_bytes)
            <= 0.6 * budget]
    if not fits:
        # Nothing fits even at B=1; rely on vmem_limit clamp (flash path TODO).
        return 1
    even_multi = [b for b in fits if (N // b) >= 2 and (N // b) % 2 == 0]
    multi = [b for b in fits if (N // b) >= 2]
    for group in (even_multi, multi, fits):
        if group:
            return max(group)
    return 1


def single_head_self_attention(x, wq, wk, wv, *, compute_dtype=jnp.bfloat16,
                               cast_inputs_to_compute_dtype=False):
    """x: (N, L, D); wq/wk/wv: (D, D) in nn.Linear convention (y = x @ W.T).

    compute_dtype controls the MXU operand dtype (bf16 = perf path; f32 keeps
    exact softmax normalization).  cast_inputs_to_compute_dtype=True casts x
    in the wrapper so the per-step input DMA moves half the bytes (useful in
    the bandwidth-bound small-D regime on v5e/v6e)."""
    N, L, D = x.shape
    out_dtype = x.dtype
    scale = 1.0 / (float(D) ** 0.5)

    # Host-side weight prep: pre-transpose (kernel needs no .T), fold the
    # attention scale into Wq, stack to (3, D, D), emit in compute_dtype so
    # the constant block is never re-cast inside the grid loop.
    w_qkv = jnp.stack([wq.T * scale, wk.T, wv.T]).astype(compute_dtype)

    if cast_inputs_to_compute_dtype and x.dtype != compute_dtype:
        x = x.astype(compute_dtype)

    x_bytes = jnp.dtype(x.dtype).itemsize
    out_bytes = jnp.dtype(out_dtype).itemsize
    cdt_bytes = jnp.dtype(compute_dtype).itemsize

    budget = _vmem_budget_bytes()
    B = _pick_batch_block(N, L, D, budget, x_bytes, out_bytes, cdt_bytes)
    grid = (N // B,)

    est = _vmem_estimate_bytes(B, L, D, x_bytes, out_bytes, cdt_bytes)
    vmem_limit = int(min(max(int(1.5 * est), 16 * 1024 * 1024), budget))

    kernel = _make_kernel(B, L, D, compute_dtype)
    return pl.pallas_call(
        kernel,
        out_shape=jax.ShapeDtypeStruct((N, L, D), out_dtype),
        grid_spec=pltpu.PrefetchScalarGridSpec(
            num_scalar_prefetch=0,
            grid=grid,
            in_specs=[
                pl.BlockSpec((B, L, D), lambda n: (n, 0, 0)),   # x: B rows/step
                pl.BlockSpec((3, D, D), lambda n: (0, 0, 0)),   # weights, resident
            ],
            out_specs=pl.BlockSpec((B, L, D), lambda n: (n, 0, 0)),
        ),
        compiler_params=pltpu.CompilerParams(
            dimension_semantics=("parallel",),
            vmem_limit_bytes=vmem_limit,
        ),
    )(x, w_qkv)


def _reference(x, wq, wk, wv):
    # pure-JAX reference matching the PyTorch forward
    q = jnp.einsum("nld,ed->nle", x, wq)
    k = jnp.einsum("nld,ed->nle", x, wk)
    v = jnp.einsum("nld,ed->nle", x, wv)
    d = x.shape[-1]
    scores = jnp.einsum("nld,nmd->nlm", q, k) / (d ** 0.5)
    attn = jax.nn.softmax(scores, axis=-1)
    return jnp.einsum("nlm,nmd->nld", attn, v)


if __name__ == "__main__":
    N, L, D = 2, 8, 32
    key = jax.random.PRNGKey(0)
    kx, kq, kk, kv = jax.random.split(key, 4)

    x = jax.random.normal(kx, (N, L, D), dtype=jnp.float32)
    # deterministic init matching nn.Linear weight shape (out_features, in_features)
    bound = 1.0 / (D ** 0.5)
    wq = jax.random.uniform(kq, (D, D), jnp.float32, -bound, bound)
    wk = jax.random.uniform(kk, (D, D), jnp.float32, -bound, bound)
    wv = jax.random.uniform(kv, (D, D), jnp.float32, -bound, bound)

    ref = _reference(x, wq, wk, wv)

    # Exact path (f32 MXU operands, exact reciprocal): tight tolerance.
    out_f32 = jax.block_until_ready(
        single_head_self_attention(x, wq, wk, wv, compute_dtype=jnp.float32)
    )
    assert out_f32.shape == (N, L, D)
    assert jnp.allclose(out_f32, ref, atol=1e-5, rtol=1e-5), "f32 path mismatch"

    # Default perf path (bf16 MXU operands, f32 accumulation, approx recip).
    out_bf16 = jax.block_until_ready(single_head_self_attention(x, wq, wk, wv))
    assert out_bf16.shape == (N, L, D)
    assert jnp.allclose(out_bf16, ref, atol=5e-2, rtol=5e-2), "bf16 path mismatch"

    # Perf path with wrapper-side bf16 input cast (halves per-step x DMA bytes).
    out_cast = jax.block_until_ready(
        single_head_self_attention(x, wq, wk, wv,
                                   cast_inputs_to_compute_dtype=True)
    )
    assert jnp.allclose(out_cast, ref, atol=5e-2, rtol=5e-2), "cast path mismatch"

    print("KERNEL_OK")
</pallas_src>

<mosaic_0001>
module attributes {stable_mosaic.version = 11 : i64} {
  func.func @kernel(%arg0: i32, %arg1: memref<1x8x32xf32, #tpu.memory_space<vmem>>, %arg2: memref<3x32x32xf32, #tpu.memory_space<vmem>>, %arg3: memref<1x8x32xf32, #tpu.memory_space<vmem>>) attributes {dimension_semantics = [#tpu.dimension_semantics<parallel>], iteration_bounds = array<i64: 2>, scalar_prefetch = 0 : i64, scratch_operands = 0 : i64, tpu.core_type = #tpu.core_type<tc>, window_params = [{transform_indices = @transform_0, window_bounds = array<i64: 1, 8, 32>}, {pipeline_mode = #tpu.pipeline_mode<synchronous>, transform_indices = @transform_1, window_bounds = array<i64: 3, 32, 32>}, {transform_indices = @transform_2, window_bounds = array<i64: 1, 8, 32>}]} {
    %c0 = arith.constant 0 : index
    %c0_0 = arith.constant 0 : index
    %c0_1 = arith.constant 0 : index
    %0 = vector.load %arg1[%c0, %c0_0, %c0_1] : memref<1x8x32xf32, #tpu.memory_space<vmem>>, vector<1x8x32xf32>
    %1 = vector.shape_cast %0 : vector<1x8x32xf32> to vector<8x32xf32>
    %c0_2 = arith.constant 0 : index
    %c0_3 = arith.constant 0 : index
    %c0_4 = arith.constant 0 : index
    %2 = vector.load %arg2[%c0_2, %c0_3, %c0_4] : memref<3x32x32xf32, #tpu.memory_space<vmem>>, vector<1x32x32xf32>
    %3 = vector.shape_cast %2 : vector<1x32x32xf32> to vector<32x32xf32>
    %cst = arith.constant dense<0.000000e+00> : vector<8x32xf32>
    %4 = tpu.matmul %1, %3, %cst {dimension_numbers = #tpu.dot_dimension_numbers<[1], [0], [0], [1], [0, 0, 1, 1], [], []>} : vector<8x32xf32>, vector<32x32xf32>, vector<8x32xf32> -> vector<8x32xf32>
    %c1 = arith.constant 1 : index
    %c0_5 = arith.constant 0 : index
    %c0_6 = arith.constant 0 : index
    %5 = vector.load %arg2[%c1, %c0_5, %c0_6] : memref<3x32x32xf32, #tpu.memory_space<vmem>>, vector<1x32x32xf32>
    %6 = vector.shape_cast %5 : vector<1x32x32xf32> to vector<32x32xf32>
    %cst_7 = arith.constant dense<0.000000e+00> : vector<8x32xf32>
    %7 = tpu.matmul %1, %6, %cst_7 {dimension_numbers = #tpu.dot_dimension_numbers<[1], [0], [0], [1], [0, 0, 1, 1], [], []>} : vector<8x32xf32>, vector<32x32xf32>, vector<8x32xf32> -> vector<8x32xf32>
    %c2 = arith.constant 2 : index
    %c0_8 = arith.constant 0 : index
    %c0_9 = arith.constant 0 : index
    %8 = vector.load %arg2[%c2, %c0_8, %c0_9] : memref<3x32x32xf32, #tpu.memory_space<vmem>>, vector<1x32x32xf32>
    %9 = vector.shape_cast %8 : vector<1x32x32xf32> to vector<32x32xf32>
    %cst_10 = arith.constant dense<0.000000e+00> : vector<8x32xf32>
    %10 = tpu.matmul %1, %9, %cst_10 {dimension_numbers = #tpu.dot_dimension_numbers<[1], [0], [0], [1], [0, 0, 1, 1], [], []>} : vector<8x32xf32>, vector<32x32xf32>, vector<8x32xf32> -> vector<8x32xf32>
    %11 = vector.shape_cast %4 : vector<8x32xf32> to vector<1x8x32xf32>
    %12 = vector.shape_cast %7 : vector<8x32xf32> to vector<1x8x32xf32>
    %13 = vector.shape_cast %10 : vector<8x32xf32> to vector<1x8x32xf32>
    "tpu.trace_start"() <{level = 10 : i32, message = "bqd,bkd->bqk"}> : () -> ()
    %cst_11 = arith.constant dense<0.000000e+00> : vector<1x8x8xf32>
    %14 = tpu.matmul %11, %12, %cst_11 {dimension_numbers = #tpu.dot_dimension_numbers<[2], [2], [1], [1], [0, 0, 0, 1, 1, 1], [0], [0]>} : vector<1x8x32xf32>, vector<1x8x32xf32>, vector<1x8x8xf32> -> vector<1x8x8xf32>
    "tpu.trace_stop"() : () -> ()
    %cst_12 = arith.constant dense<0xFF800000> : vector<1x8xf32>
    %15 = vector.multi_reduction <maximumf>, %14, %cst_12 [2] : vector<1x8x8xf32> to vector<1x8xf32>
    %16 = vector.shape_cast %15 : vector<1x8xf32> to vector<1x8x1xf32>
    %17 = vector.broadcast %16 : vector<1x8x1xf32> to vector<1x8x8xf32>
    %18 = arith.subf %14, %17 : vector<1x8x8xf32>
    %19 = math.exp %18 : vector<1x8x8xf32>
    %cst_13 = arith.constant dense<0.000000e+00> : vector<1x8xf32>
    %20 = vector.multi_reduction <add>, %19, %cst_13 [2] : vector<1x8x8xf32> to vector<1x8xf32>
    %21 = vector.shape_cast %20 : vector<1x8xf32> to vector<1x8x1xf32>
    "tpu.trace_start"() <{level = 10 : i32, message = "bqk,bkd->bqd"}> : () -> ()
    %cst_14 = arith.constant dense<0.000000e+00> : vector<1x8x32xf32>
    %22 = tpu.matmul %19, %13, %cst_14 {dimension_numbers = #tpu.dot_dimension_numbers<[2], [1], [1], [2], [0, 0, 0, 1, 1, 2], [0], [0]>} : vector<1x8x8xf32>, vector<1x8x32xf32>, vector<1x8x32xf32> -> vector<1x8x32xf32>
    "tpu.trace_stop"() : () -> ()
    %23 = tpu.reciprocal %21 : vector<1x8x1xf32> -> vector<1x8x1xf32>
    %24 = vector.broadcast %23 : vector<1x8x1xf32> to vector<1x8x32xf32>
    %25 = arith.mulf %22, %24 : vector<1x8x32xf32>
    %c0_15 = arith.constant 0 : index
    %c0_16 = arith.constant 0 : index
    %c0_17 = arith.constant 0 : index
    %26 = vector.load %arg3[%c0_15, %c0_16, %c0_17] : memref<1x8x32xf32, #tpu.memory_space<vmem>>, vector<1x8x32xf32>
    tpu.vector_store %arg3[%c0_15, %c0_16, %c0_17], %25 {strides = array<i32>} : memref<1x8x32xf32, #tpu.memory_space<vmem>>, vector<1x8x32xf32>,
    return
  }
  func.func @transform_0(%arg0: i32) -> (i32, i32, i32) {
    %c0_i32 = arith.constant 0 : i32
    %c0_i32_0 = arith.constant 0 : i32
    %c0_i32_1 = arith.constant 0 : i32
    return %arg0, %c0_i32, %c0_i32_0 : i32, i32, i32
  }
  func.func @transform_1(%arg0: i32) -> (i32, i32, i32) {
    %c0_i32 = arith.constant 0 : i32
    %c0_i32_0 = arith.constant 0 : i32
    %c0_i32_1 = arith.constant 0 : i32
    %c0_i32_2 = arith.constant 0 : i32
    return %c0_i32, %c0_i32_0, %c0_i32_1 : i32, i32, i32
  }
  func.func @transform_2(%arg0: i32) -> (i32, i32, i32) {
    %c0_i32 = arith.constant 0 : i32
    %c0_i32_0 = arith.constant 0 : i32
    %c0_i32_1 = arith.constant 0 : i32
    return %arg0, %c0_i32, %c0_i32_0 : i32, i32, i32
  }
}

</mosaic_0001>

<llo_original>
// kernel: tpu_custom_call.1
$region0: #{tpu_custom_call.1}
  #allocation0 [shape = 'u32[]', space=smem, size = 0x4, offset = 0x4, fixed_abs, tag = 'smem constant byte address 0x4 - core index']
  #allocation1 [shape = 'u32[144,128]{1,0:T(1,128)}', space=vmem, size = 0x12000, scoped, tag = 'internal scratch']
  %s0 = inlined_call_operand.hbm [shape: f32[2,8,32], index: 0, kind: input, shape index: {}]
  %s1 = inlined_call_operand.hbm [shape: f32[3,32,32], index: 1, kind: input, shape index: {}]
  %s2 = inlined_call_operand.hbm [shape: f32[2,8,32], index: 2, kind: output, shape index: {}]
  %s3 = sld [smem:[#allocation0]]
  $region49: #{tpu_custom_call.1} parent=0
    _
  %s5 = ssub.s32 1, %s3
  %s6 = scalar_select 0, %s5, %s3
  $region1: #{tpu_custom_call.1} parent=0
    #allocation2 [shape = 'u8[8192]{0}', space=vmem, size = 0x2000, scoped, tag = 'input window, operand 0']
    #allocation3 [shape = 's32[2]{0}', space=sflag, size = 0x8, scoped, tag = 'scoped memory for tpu_custom_call.1']
    #allocation4 [shape = 's32[2]{0}', space=sflag, size = 0x8, scoped, tag = 'scoped memory for tpu_custom_call.1']
    #allocation5 [shape = 'u8[49152]{0}', space=vmem, size = 0xc000, scoped, tag = 'input window, operand 1, single buffered']
    #allocation6 [shape = 's32[1]{0}', space=sflag, size = 0x4, scoped, tag = 'scoped memory for tpu_custom_call.1']
    #allocation7 [shape = 'u8[8192]{0}', space=vmem, size = 0x2000, scoped, tag = 'output window, operand 0']
    %7 = vsyncpa [#allocation3], 0
    %s8 = scalar_lea.sflag [#allocation3], 1
    %9 = vsyncpa %s8, 0
    %10 = vsyncpa [#allocation6], 0
    %11 = vsyncpa [#allocation4], 0
    %s12 = scalar_lea.sflag [#allocation4], 1
    %13 = vsyncpa %s12, 0
    loop: start=0, step=1, limit=4
    $region2: #{tpu_custom_call.1} parent=1 // loop_pre_header
      _
    $region3: #{tpu_custom_call.1} parent=1 // loop_header
      %s15 = sphi 0, %s19
      %p16 = scmp.ge.s32.totalorder %s15, 4
      %s25 = sphi 0, %s27
      %s28 = sphi 0, %s25
      %s29 = sphi 0, %s28
      %s45 = sphi 0, %s29
      %s49 = sphi 0, %s49
      %s51 = sphi 0, %s49
      %s52 = sphi 0, %s51
      %s66 = sphi 0, %s52
      %s72 = sphi 0, %s74
      %s75 = sphi 0, %s72
      %s76 = sphi 0, %s75
      %s92 = sphi 0, %s76
    $region4: #{tpu_custom_call.1} parent=1 // loop_header_branch
      %18 = sbr.rel (%p16) target = $region8
    $region5: #{tpu_custom_call.1} parent=1 // loop_body
      %s20 = ssub.s32 %s15, 1
      %s21 = ssub.s32 %s15, 2
      %s22 = sadd.s32 %s15, 1
      %s23 = ssub.s32 %s15, %s22
      %p24 = scmp.eq.s32.totalorder %s23, 0
      %s26 = sadd.s32 %s25, 1
      %s27 = scalar_select %p24, %s25, %s26
      %p30 = pneg %p24
      %p31 = scmp.eq.s32.totalorder %s15, 1
      %p32 = por %p30, %p31
      %p33 = scmp.ne.s32.totalorder %s25, %s28
      %p34 = scmp.eq.s32.totalorder %s15, 0
      %p35 = por %p33, %p34
      %p36 = scmp.ne.s32.totalorder %s25, %s28
      %p37 = scmp.eq.s32.totalorder %s20, 1
      %p38 = por %p36, %p37
      %p39 = scmp.ne.s32.totalorder %s28, %s29
      %p40 = scmp.eq.s32.totalorder %s20, 0
      %p41 = por %p39, %p40
      %p42 = scmp.ne.s32.totalorder %s28, %s29
      %p43 = scmp.eq.s32.totalorder %s21, 1
      %p44 = por %p42, %p43
      %p46 = scmp.ne.s32.totalorder %s29, %s45
      %p47 = scmp.eq.s32.totalorder %s21, 0
      %p48 = por %p46, %p47
      %s50 = sadd.s32 %s49, 1
      %p53 = scmp.eq.s32.totalorder %s15, 1
      %p54 = scmp.ne.s32.totalorder %s49, %s51
      %p55 = scmp.eq.s32.totalorder %s15, 0
      %p56 = por %p54, %p55
      %p57 = scmp.ne.s32.totalorder %s49, %s51
      %p58 = scmp.eq.s32.totalorder %s20, 1
      %p59 = por %p57, %p58
      %p60 = scmp.ne.s32.totalorder %s51, %s52
      %p61 = scmp.eq.s32.totalorder %s20, 0
      %p62 = por %p60, %p61
      %p63 = scmp.ne.s32.totalorder %s51, %s52
      %p64 = scmp.eq.s32.totalorder %s21, 1
      %p65 = por %p63, %p64
      %p67 = scmp.ne.s32.totalorder %s52, %s66
      %p68 = scmp.eq.s32.totalorder %s21, 0
      %p69 = por %p67, %p68
      %s70 = ssub.s32 %s15, %s22
      %p71 = scmp.eq.s32.totalorder %s70, 0
      %s73 = sadd.s32 %s72, 1
      %s74 = scalar_select %p71, %s72, %s73
      %p77 = pneg %p71
      %p78 = scmp.eq.s32.totalorder %s15, 1
      %p79 = por %p77, %p78
      %p80 = scmp.ne.s32.totalorder %s72, %s75
      %p81 = scmp.eq.s32.totalorder %s15, 0
      %p82 = por %p80, %p81
      %p83 = scmp.ne.s32.totalorder %s72, %s75
      %p84 = scmp.eq.s32.totalorder %s20, 1
      %p85 = por %p83, %p84
      %p86 = scmp.ne.s32.totalorder %s75, %s76
      %p87 = scmp.eq.s32.totalorder %s20, 0
      %p88 = por %p86, %p87
      %p89 = scmp.ne.s32.totalorder %s75, %s76
      %p90 = scmp.eq.s32.totalorder %s21, 1
      %p91 = por %p89, %p90
      %p93 = scmp.ne.s32.totalorder %s76, %s92
      %p94 = scmp.eq.s32.totalorder %s21, 0
      %p95 = por %p93, %p94
      %p96 = scmp.le.s32.totalorder 1, %s15
      %p97 = scmp.lt.s32.totalorder %s15, 3
      %p98 = pnand %p96, %p97
      %p99 = pneg %p98
      // Predicated region
      $region9: #{tpu_custom_call.1} parent=5 // pred_check
        _
      $region10: #{tpu_custom_call.1} parent=5 // pred_check_branch
        %101 = sbr.rel (%p98) target = $region12
      $region11: #{tpu_custom_call.1} parent=5 // pred_region
        %s102 = ssub.s32 %s15, 1
        // Predicated region
        $region13: #{tpu_custom_call.1} parent=11 // pred_check
          %p103 = pneg %p62
        $region14: #{tpu_custom_call.1} parent=11 // pred_check_branch
          %105 = sbr.rel (%p103) target = $region16
        $region15: #{tpu_custom_call.1} parent=11 // pred_region
          %s107 = ssub.s32 1536, 1536
          %108 = vsyncadd [#allocation6], %s107
          %s109 = sshll.u32 [#allocation5], 4
          %s110 = int_to_ptr.vmem [resolvable:$true] %s109
          %115 = dma.hbm_to_vmem [thread:$0]  %s1, 1536, %s110, [#allocation6], 128, 128, 8
        $region16: #{tpu_custom_call.1} parent=11 // pred_fallthru
          _
      $region12: #{tpu_custom_call.1} parent=5 // pred_fallthru
        _
      %p116 = scmp.lt.s32.totalorder %s15, 2
      // Predicated region
      $region17: #{tpu_custom_call.1} parent=5 // pred_check
        %p117 = pneg %p116
      $region18: #{tpu_custom_call.1} parent=5 // pred_check_branch
        %119 = sbr.rel (%p117) target = $region20
      $region19: #{tpu_custom_call.1} parent=5 // pred_region
        // Predicated region
        $region21: #{tpu_custom_call.1} parent=19 // pred_check
          %p120 = pneg %p35
        $region22: #{tpu_custom_call.1} parent=19 // pred_check_branch
          %122 = sbr.rel (%p120) target = $region24
        $region23: #{tpu_custom_call.1} parent=19 // pred_region
          %s123 = sand.u32 %s25, 1
          %s124 = scalar_lea.sflag [#allocation3], %s123
          %s125 = sand.u32 %s25, 1
          %s126 = smul.addr %s125, 8
          %s127 = scalar_lea.vmem [#allocation2], %s126
          %s129 = ssub.s32 128, 128
          %130 = vsyncadd %s124, %s129
          %s131 = smul.addr %s15, 128
          %s132 = scalar_lea.hbm %s0, %s131
          %s134 = sshll.u32 %s127, 4
          %s135 = int_to_ptr.vmem [resolvable:$true] %s134
          %137 = dma.hbm_to_vmem [thread:$0]  %s132, 128, %s135, %s124
        $region24: #{tpu_custom_call.1} parent=19 // pred_fallthru
          _
      $region20: #{tpu_custom_call.1} parent=5 // pred_fallthru
        _
      %p138 = scmp.le.s32.totalorder 1, %s15
      %p139 = scmp.lt.s32.totalorder %s15, 3
      %p140 = pnand %p138, %p139
      %p141 = pneg %p140
      // Predicated region
      $region25: #{tpu_custom_call.1} parent=5 // pred_check
        _
      $region26: #{tpu_custom_call.1} parent=5 // pred_check_branch
        %143 = sbr.rel (%p140) target = $region28
      $region27: #{tpu_custom_call.1} parent=5 // pred_region
        %s144 = ssub.s32 %s15, 1
        %s145 = sand.u32 %s28, 1
        %s146 = scalar_lea.sflag [#allocation3], %s145
        %s147 = sand.u32 %s28, 1
        %s148 = smul.addr %s147, 8
        %s149 = scalar_lea.vmem [#allocation2], %s148
        // Predicated region
        $region29: #{tpu_custom_call.1} parent=27 // pred_check
          %p150 = pneg %p41
        $region30: #{tpu_custom_call.1} parent=27 // pred_check_branch
          %152 = sbr.rel (%p150) target = $region32
        $region31: #{tpu_custom_call.1} parent=27 // pred_region
          %153 = dma.done %s146, 128
        $region32: #{tpu_custom_call.1} parent=27 // pred_fallthru
          _
        // Predicated region
        $region33: #{tpu_custom_call.1} parent=27 // pred_check
          %p154 = pneg %p62
        $region34: #{tpu_custom_call.1} parent=27 // pred_check_branch
          %156 = sbr.rel (%p154) target = $region36
        $region35: #{tpu_custom_call.1} parent=27 // pred_region
          %157 = dma.done [#allocation6], 1536
        $region36: #{tpu_custom_call.1} parent=27 // pred_fallthru
          _
        %s158 = sand.u32 %s28, 1
        %s159 = scalar_lea.sflag [#allocation3], %s158
        %s160 = sand.u32 %s28, 1
        %s161 = smul.addr %s160, 8
        %s162 = scalar_lea.vmem [#allocation2], %s161
        %p163 = pneg %p41
        %p164 = pneg %p38
        %p165 = pneg %p62
        %p166 = pneg %p59
        %p167 = pneg %p88
        %p168 = pneg %p85
        %s169 = sand.u32 %s75, 1
        %s170 = scalar_lea.sflag [#allocation4], %s169
        %s171 = sand.u32 %s75, 1
        %s172 = smul.addr %s171, 8
        %s173 = scalar_lea.vmem [#allocation7], %s172
        %v174 = vld [vmem:[%s149] sm:$0xff]
        %v175 = vld [vmem:[#allocation5] sm:$0xff]
        %v176 = vld [vmem:[#allocation5 + $0x8] sm:$0xff]
        %v177 = vld [vmem:[#allocation5 + $0x10] sm:$0xff]
        %v178 = vld [vmem:[#allocation5 + $0x18] sm:$0xff]
        %vm179 = vcmask 261120
        %v181 = vsel %vm179, %v174, 0
        %183 = vmatprep.subr.mxu0 0.0
        %184 = vmatpush1.msra.mxu0 %v175
        %185 = vmatprep.subr.mxu0 0.0
        %186 = vmatpush1.msra.mxu0 %v176
        %187 = vmatprep.subr.mxu0 0.0
        %188 = vmatpush1.msra.mxu0 %v177
        %189 = vmatprep.subr.mxu0 0.0
        %190 = vmatpush1.msra.mxu0 %v178
        %191 = vmatprep.subr.mxu0 0.0
        %192 = vmatpush1.msra.mxu0 0.0
        %193 = vmatprep.subr.mxu0 0.0
        %194 = vmatpush1.msra.mxu0 0.0
        %195 = vmatprep.subr.mxu0 0.0
        %196 = vmatpush1.msra.mxu0 0.0
        %197 = vmatprep.subr.mxu0 0.0
        %198 = vmatpush1.msra.mxu0 0.0
        %199 = vmatprep.subr.mxu0 0.0
        %200 = vmatpush1.msra.mxu0 0.0
        %201 = vmatprep.subr.mxu0 0.0
        %202 = vmatpush1.msra.mxu0 0.0
        %203 = vmatprep.subr.mxu0 0.0
        %204 = vmatpush1.msra.mxu0 0.0
        %205 = vmatprep.subr.mxu0 0.0
        %206 = vmatpush1.msra.mxu0 0.0
        %207 = vmatprep.subr.mxu0 0.0
        %208 = vmatpush1.msra.mxu0 0.0
        %209 = vmatprep.subr.mxu0 0.0
        %210 = vmatpush1.msra.mxu0 0.0
        %211 = vmatprep.subr.mxu0 0.0
        %212 = vmatpush1.msra.mxu0 0.0
        %213 = vmatprep.subr.mxu0 0.0
        %214 = vmatpush1.msra.mxu0 0.0
        %215 = vmatprep.subr.mxu0 0.0
        %216 = vmatpush1.msra.mxu0 0.0
        %217 = vmatprep.subr.mxu0 0.0
        %218 = vmatpush1.msra.mxu0 0.0
        %219 = vmatprep.subr.mxu0 0.0
        %220 = vmatpush1.msra.mxu0 0.0
        %221 = vmatprep.subr.mxu0 0.0
        %222 = vmatpush1.msra.mxu0 0.0
        %223 = vmatprep.subr.mxu0 0.0
        %224 = vmatpush1.msra.mxu0 0.0
        %225 = vmatprep.subr.mxu0 0.0
        %226 = vmatpush1.msra.mxu0 0.0
        %227 = vmatprep.subr.mxu0 0.0
        %228 = vmatpush1.msra.mxu0 0.0
        %229 = vmatprep.subr.mxu0 0.0
        %230 = vmatpush1.msra.mxu0 0.0
        %231 = vmatprep.subr.mxu0 0.0
        %232 = vmatpush1.msra.mxu0 0.0
        %233 = vmatprep.subr.mxu0 0.0
        %234 = vmatpush1.msra.mxu0 0.0
        %235 = vmatprep.subr.mxu0 0.0
        %236 = vmatpush1.msra.mxu0 0.0
        %237 = vmatprep.subr.mxu0 0.0
        %238 = vmatpush1.msra.mxu0 0.0
        %239 = vmatprep.subr.mxu0 0.0
        %240 = vmatpush1.msra.mxu0 0.0
        %241 = vmatprep.subr.mxu0 0.0
        %242 = vmatpush1.msra.mxu0 0.0
        %243 = vmatprep.subr.mxu0 0.0
        %244 = vmatpush1.msra.mxu0 0.0
        %245 = vmatprep.subr.mxu0 0.0
        %246 = vmatpush1.msra.mxu0 0.0
        %247 = vmatprep.mubr.f32.mxu0 0.0
        %248 = vmatmul.mubr.f32.gmra.mrb[0].mxu0 %v181
        %v249 = vpop.f32.mrb[0].mxu0
        %v250 = vadd.f32 0.0, %v249
        %v251 = vpop.f32.mrb[0].mxu0
        %252 = vdwg.mxu0
        %s253 = scalar_lea.vmem [#allocation5], 32
        %v254 = vld [vmem:[%s253] sm:$0xff]
        %v255 = vld [vmem:[%s253 + $0x8] sm:$0xff]
        %v256 = vld [vmem:[%s253 + $0x10] sm:$0xff]
        %v257 = vld [vmem:[%s253 + $0x18] sm:$0xff]
        %258 = vmatprep.subr.mxu0 0.0
        %259 = vmatpush1.msra.mxu0 %v254
        %260 = vmatprep.subr.mxu0 0.0
        %261 = vmatpush1.msra.mxu0 %v255
        %262 = vmatprep.subr.mxu0 0.0
        %263 = vmatpush1.msra.mxu0 %v256
        %264 = vmatprep.subr.mxu0 0.0
        %265 = vmatpush1.msra.mxu0 %v257
        %266 = vmatprep.subr.mxu0 0.0
        %267 = vmatpush1.msra.mxu0 0.0
        %268 = vmatprep.subr.mxu0 0.0
        %269 = vmatpush1.msra.mxu0 0.0
        %270 = vmatprep.subr.mxu0 0.0
        %271 = vmatpush1.msra.mxu0 0.0
        %272 = vmatprep.subr.mxu0 0.0
        %273 = vmatpush1.msra.mxu0 0.0
        %274 = vmatprep.subr.mxu0 0.0
        %275 = vmatpush1.msra.mxu0 0.0
        %276 = vmatprep.subr.mxu0 0.0
        %277 = vmatpush1.msra.mxu0 0.0
        %278 = vmatprep.subr.mxu0 0.0
        %279 = vmatpush1.msra.mxu0 0.0
        %280 = vmatprep.subr.mxu0 0.0
        %281 = vmatpush1.msra.mxu0 0.0
        %282 = vmatprep.subr.mxu0 0.0
        %283 = vmatpush1.msra.mxu0 0.0
        %284 = vmatprep.subr.mxu0 0.0
        %285 = vmatpush1.msra.mxu0 0.0
        %286 = vmatprep.subr.mxu0 0.0
        %287 = vmatpush1.msra.mxu0 0.0
        %288 = vmatprep.subr.mxu0 0.0
        %289 = vmatpush1.msra.mxu0 0.0
        %290 = vmatprep.subr.mxu0 0.0
        %291 = vmatpush1.msra.mxu0 0.0
        %292 = vmatprep.subr.mxu0 0.0
        %293 = vmatpush1.msra.mxu0 0.0
        %294 = vmatprep.subr.mxu0 0.0
        %295 = vmatpush1.msra.mxu0 0.0
        %296 = vmatprep.subr.mxu0 0.0
        %297 = vmatpush1.msra.mxu0 0.0
        %298 = vmatprep.subr.mxu0 0.0
        %299 = vmatpush1.msra.mxu0 0.0
        %300 = vmatprep.subr.mxu0 0.0
        %301 = vmatpush1.msra.mxu0 0.0
        %302 = vmatprep.subr.mxu0 0.0
        %303 = vmatpush1.msra.mxu0 0.0
        %304 = vmatprep.subr.mxu0 0.0
        %305 = vmatpush1.msra.mxu0 0.0
        %306 = vmatprep.subr.mxu0 0.0
        %307 = vmatpush1.msra.mxu0 0.0
        %308 = vmatprep.subr.mxu0 0.0
        %309 = vmatpush1.msra.mxu0 0.0
        %310 = vmatprep.subr.mxu0 0.0
        %311 = vmatpush1.msra.mxu0 0.0
        %312 = vmatprep.subr.mxu0 0.0
        %313 = vmatpush1.msra.mxu0 0.0
        %314 = vmatprep.subr.mxu0 0.0
        %315 = vmatpush1.msra.mxu0 0.0
        %316 = vmatprep.subr.mxu0 0.0
        %317 = vmatpush1.msra.mxu0 0.0
        %318 = vmatprep.subr.mxu0 0.0
        %319 = vmatpush1.msra.mxu0 0.0
        %320 = vmatprep.subr.mxu0 0.0
        %321 = vmatpush1.msra.mxu0 0.0
        %322 = vmatprep.mubr.f32.mxu0 0.0
        %323 = vmatmul.mubr.f32.gmra.mrb[0].mxu0 %v181
        %v324 = vpop.f32.mrb[0].mxu0
        %v325 = vadd.f32 0.0, %v324
        %v326 = vpop.f32.mrb[0].mxu0
        %327 = vdwg.mxu0
        %s328 = scalar_lea.vmem [#allocation5], 64
        %v329 = vld [vmem:[%s328] sm:$0xff]
        %v330 = vld [vmem:[%s328 + $0x8] sm:$0xff]
        %v331 = vld [vmem:[%s328 + $0x10] sm:$0xff]
        %v332 = vld [vmem:[%s328 + $0x18] sm:$0xff]
        %333 = vmatprep.subr.mxu0 0.0
        %334 = vmatpush1.msra.mxu0 %v329
        %335 = vmatprep.subr.mxu0 0.0
        %336 = vmatpush1.msra.mxu0 %v330
        %337 = vmatprep.subr.mxu0 0.0
        %338 = vmatpush1.msra.mxu0 %v331
        %339 = vmatprep.subr.mxu0 0.0
        %340 = vmatpush1.msra.mxu0 %v332
        %341 = vmatprep.subr.mxu0 0.0
        %342 = vmatpush1.msra.mxu0 0.0
        %343 = vmatprep.subr.mxu0 0.0
        %344 = vmatpush1.msra.mxu0 0.0
        %345 = vmatprep.subr.mxu0 0.0
        %346 = vmatpush1.msra.mxu0 0.0
        %347 = vmatprep.subr.mxu0 0.0
        %348 = vmatpush1.msra.mxu0 0.0
        %349 = vmatprep.subr.mxu0 0.0
        %350 = vmatpush1.msra.mxu0 0.0
        %351 = vmatprep.subr.mxu0 0.0
        %352 = vmatpush1.msra.mxu0 0.0
        %353 = vmatprep.subr.mxu0 0.0
        %354 = vmatpush1.msra.mxu0 0.0
        %355 = vmatprep.subr.mxu0 0.0
        %356 = vmatpush1.msra.mxu0 0.0
        %357 = vmatprep.subr.mxu0 0.0
        %358 = vmatpush1.msra.mxu0 0.0
        %359 = vmatprep.subr.mxu0 0.0
        %360 = vmatpush1.msra.mxu0 0.0
        %361 = vmatprep.subr.mxu0 0.0
        %362 = vmatpush1.msra.mxu0 0.0
        %363 = vmatprep.subr.mxu0 0.0
        %364 = vmatpush1.msra.mxu0 0.0
        %365 = vmatprep.subr.mxu0 0.0
        %366 = vmatpush1.msra.mxu0 0.0
        %367 = vmatprep.subr.mxu0 0.0
        %368 = vmatpush1.msra.mxu0 0.0
        %369 = vmatprep.subr.mxu0 0.0
        %370 = vmatpush1.msra.mxu0 0.0
        %371 = vmatprep.subr.mxu0 0.0
        %372 = vmatpush1.msra.mxu0 0.0
        %373 = vmatprep.subr.mxu0 0.0
        %374 = vmatpush1.msra.mxu0 0.0
        %375 = vmatprep.subr.mxu0 0.0
        %376 = vmatpush1.msra.mxu0 0.0
        %377 = vmatprep.subr.mxu0 0.0
        %378 = vmatpush1.msra.mxu0 0.0
        %379 = vmatprep.subr.mxu0 0.0
        %380 = vmatpush1.msra.mxu0 0.0
        %381 = vmatprep.subr.mxu0 0.0
        %382 = vmatpush1.msra.mxu0 0.0
        %383 = vmatprep.subr.mxu0 0.0
        %384 = vmatpush1.msra.mxu0 0.0
        %385 = vmatprep.subr.mxu0 0.0
        %386 = vmatpush1.msra.mxu0 0.0
        %387 = vmatprep.subr.mxu0 0.0
        %388 = vmatpush1.msra.mxu0 0.0
        %389 = vmatprep.subr.mxu0 0.0
        %390 = vmatpush1.msra.mxu0 0.0
        %391 = vmatprep.subr.mxu0 0.0
        %392 = vmatpush1.msra.mxu0 0.0
        %393 = vmatprep.subr.mxu0 0.0
        %394 = vmatpush1.msra.mxu0 0.0
        %395 = vmatprep.subr.mxu0 0.0
        %396 = vmatpush1.msra.mxu0 0.0
        %397 = vmatprep.mubr.f32.mxu0 0.0
        %398 = vmatmul.mubr.f32.gmra.mrb[0].mxu0 %v181
        %v399 = vpop.f32.mrb[0].mxu0
        %v400 = vadd.f32 0.0, %v399
        %v401 = vpop.f32.mrb[0].mxu0
        %402 = vdwg.mxu0
        %v404 = vsel %vm179, %v250, 0
        %v407 = vsel %vm179, %v325, 0
        %409 = vmatprep.subr.mxu0 0.0
        %410 = vmatpush1.xpose.msra.mxu0 %v407
        %411 = vmatprep.subr.mxu0 0.0
        %412 = vmatpush1.xpose.msra.mxu0 0.0
        %413 = vmatprep.subr.mxu0 0.0
        %414 = vmatpush1.xpose.msra.mxu0 0.0
        %415 = vmatprep.subr.mxu0 0.0
        %416 = vmatpush1.xpose.msra.mxu0 0.0
        %417 = vmatprep.subr.mxu0 0.0
        %418 = vmatpush1.xpose.msra.mxu0 0.0
        %419 = vmatprep.subr.mxu0 0.0
        %420 = vmatpush1.xpose.msra.mxu0 0.0
        %421 = vmatprep.subr.mxu0 0.0
        %422 = vmatpush1.xpose.msra.mxu0 0.0
        %423 = vmatprep.subr.mxu0 0.0
        %424 = vmatpush1.xpose.msra.mxu0 0.0
        %425 = vmatprep.subr.mxu0 0.0
        %426 = vmatpush1.xpose.msra.mxu0 0.0
        %427 = vmatprep.subr.mxu0 0.0
        %428 = vmatpush1.xpose.msra.mxu0 0.0
        %429 = vmatprep.subr.mxu0 0.0
        %430 = vmatpush1.xpose.msra.mxu0 0.0
        %431 = vmatprep.subr.mxu0 0.0
        %432 = vmatpush1.xpose.msra.mxu0 0.0
        %433 = vmatprep.subr.mxu0 0.0
        %434 = vmatpush1.xpose.msra.mxu0 0.0
        %435 = vmatprep.subr.mxu0 0.0
        %436 = vmatpush1.xpose.msra.mxu0 0.0
        %437 = vmatprep.subr.mxu0 0.0
        %438 = vmatpush1.xpose.msra.mxu0 0.0
        %439 = vmatprep.subr.mxu0 0.0
        %440 = vmatpush1.xpose.msra.mxu0 0.0
        %441 = vmatprep.subr.mxu0 0.0
        %442 = vmatpush1.xpose.msra.mxu0 0.0
        %443 = vmatprep.subr.mxu0 0.0
        %444 = vmatpush1.xpose.msra.mxu0 0.0
        %445 = vmatprep.subr.mxu0 0.0
        %446 = vmatpush1.xpose.msra.mxu0 0.0
        %447 = vmatprep.subr.mxu0 0.0
        %448 = vmatpush1.xpose.msra.mxu0 0.0
        %449 = vmatprep.subr.mxu0 0.0
        %450 = vmatpush1.xpose.msra.mxu0 0.0
        %451 = vmatprep.subr.mxu0 0.0
        %452 = vmatpush1.xpose.msra.mxu0 0.0
        %453 = vmatprep.subr.mxu0 0.0
        %454 = vmatpush1.xpose.msra.mxu0 0.0
        %455 = vmatprep.subr.mxu0 0.0
        %456 = vmatpush1.xpose.msra.mxu0 0.0
        %457 = vmatprep.subr.mxu0 0.0
        %458 = vmatpush1.xpose.msra.mxu0 0.0
        %459 = vmatprep.subr.mxu0 0.0
        %460 = vmatpush1.xpose.msra.mxu0 0.0
        %461 = vmatprep.subr.mxu0 0.0
        %462 = vmatpush1.xpose.msra.mxu0 0.0
        %463 = vmatprep.subr.mxu0 0.0
        %464 = vmatpush1.xpose.msra.mxu0 0.0
        %465 = vmatprep.subr.mxu0 0.0
        %466 = vmatpush1.xpose.msra.mxu0 0.0
        %467 = vmatprep.subr.mxu0 0.0
        %468 = vmatpush1.xpose.msra.mxu0 0.0
        %469 = vmatprep.subr.mxu0 0.0
        %470 = vmatpush1.xpose.msra.mxu0 0.0
        %471 = vmatprep.subr.mxu0 0.0
        %472 = vmatpush1.xpose.msra.mxu0 0.0
        %473 = vmatprep.mubr.f32.mxu0 0.0
        %474 = vmatmul.mubr.f32.gmra.mrb[0].mxu0 %v404
        %v475 = vpop.f32.mrb[0].mxu0
        %v476 = vadd.f32 0.0, %v475
        %v477 = vpop.f32.mrb[0].mxu0
        %478 = vdwg.mxu0
        %vm479 = vcmask 64512
        %v480 = vsel %vm479, %v476, -inf
        %481 = vmax.xlane.f32.xlu0 %v480
        %v482 = vpop.xlane.xlu0 %481
        %v483 = vsub.f32 %v476, %v482
        %v484 = vmul.f32 %v483, 1.442695
        %v485 = vpow.pop %v484
        %v486 = vsel %vm479, %v485, 0.0
        %487 = vadd.xlane.f32.xlu0 %v486
        %v488 = vpop.xlane.xlu0 %487
        %v490 = vsel %vm479, %v485, 0
        %492 = vmatprep.subr.mxu0 0.0
        %493 = vmatpush1.msra.mxu0 %v400
        %494 = vmatprep.subr.mxu0 0.0
        %495 = vmatpush1.msra.mxu0 0.0
        %496 = vmatprep.subr.mxu0 0.0
        %497 = vmatpush1.msra.mxu0 0.0
        %498 = vmatprep.subr.mxu0 0.0
        %499 = vmatpush1.msra.mxu0 0.0
        %500 = vmatprep.subr.mxu0 0.0
        %501 = vmatpush1.msra.mxu0 0.0
        %502 = vmatprep.subr.mxu0 0.0
        %503 = vmatpush1.msra.mxu0 0.0
        %504 = vmatprep.subr.mxu0 0.0
        %505 = vmatpush1.msra.mxu0 0.0
        %506 = vmatprep.subr.mxu0 0.0
        %507 = vmatpush1.msra.mxu0 0.0
        %508 = vmatprep.subr.mxu0 0.0
        %509 = vmatpush1.msra.mxu0 0.0
        %510 = vmatprep.subr.mxu0 0.0
        %511 = vmatpush1.msra.mxu0 0.0
        %512 = vmatprep.subr.mxu0 0.0
        %513 = vmatpush1.msra.mxu0 0.0
        %514 = vmatprep.subr.mxu0 0.0
        %515 = vmatpush1.msra.mxu0 0.0
        %516 = vmatprep.subr.mxu0 0.0
        %517 = vmatpush1.msra.mxu0 0.0
        %518 = vmatprep.subr.mxu0 0.0
        %519 = vmatpush1.msra.mxu0 0.0
        %520 = vmatprep.subr.mxu0 0.0
        %521 = vmatpush1.msra.mxu0 0.0
        %522 = vmatprep.subr.mxu0 0.0
        %523 = vmatpush1.msra.mxu0 0.0
        %524 = vmatprep.subr.mxu0 0.0
        %525 = vmatpush1.msra.mxu0 0.0
        %526 = vmatprep.subr.mxu0 0.0
        %527 = vmatpush1.msra.mxu0 0.0
        %528 = vmatprep.subr.mxu0 0.0
        %529 = vmatpush1.msra.mxu0 0.0
        %530 = vmatprep.subr.mxu0 0.0
        %531 = vmatpush1.msra.mxu0 0.0
        %532 = vmatprep.subr.mxu0 0.0
        %533 = vmatpush1.msra.mxu0 0.0
        %534 = vmatprep.subr.mxu0 0.0
        %535 = vmatpush1.msra.mxu0 0.0
        %536 = vmatprep.subr.mxu0 0.0
        %537 = vmatpush1.msra.mxu0 0.0
        %538 = vmatprep.subr.mxu0 0.0
        %539 = vmatpush1.msra.mxu0 0.0
        %540 = vmatprep.subr.mxu0 0.0
        %541 = vmatpush1.msra.mxu0 0.0
        %542 = vmatprep.subr.mxu0 0.0
        %543 = vmatpush1.msra.mxu0 0.0
        %544 = vmatprep.subr.mxu0 0.0
        %545 = vmatpush1.msra.mxu0 0.0
        %546 = vmatprep.subr.mxu0 0.0
        %547 = vmatpush1.msra.mxu0 0.0
        %548 = vmatprep.subr.mxu0 0.0
        %549 = vmatpush1.msra.mxu0 0.0
        %550 = vmatprep.subr.mxu0 0.0
        %551 = vmatpush1.msra.mxu0 0.0
        %552 = vmatprep.subr.mxu0 0.0
        %553 = vmatpush1.msra.mxu0 0.0
        %554 = vmatprep.subr.mxu0 0.0
        %555 = vmatpush1.msra.mxu0 0.0
        %556 = vmatprep.mubr.f32.mxu0 0.0
        %557 = vmatmul.mubr.f32.gmra.mrb[0].mxu0 %v490
        %v558 = vpop.f32.mrb[0].mxu0
        %v559 = vadd.f32 0.0, %v558
        %v560 = vpop.f32.mrb[0].mxu0
        %561 = vdwg.mxu0
        %v562 = vrcp.pop %v488
        %v563 = vmul.f32 %v559, %v562
        %564 = vst.msk [vmem:[%s173] sm:$0xff] %vm179, %v563
        %s565 = sand.u32 %s75, 1
        %s566 = scalar_lea.sflag [#allocation4], %s565
        %s567 = sand.u32 %s75, 1
        %s568 = smul.addr %s567, 8
        %s569 = scalar_lea.vmem [#allocation7], %s568
        // Predicated region
        $region37: #{tpu_custom_call.1} parent=27 // pred_check
          %p570 = pneg %p85
        $region38: #{tpu_custom_call.1} parent=27 // pred_check_branch
          %572 = sbr.rel (%p570) target = $region40
        $region39: #{tpu_custom_call.1} parent=27 // pred_region
          %s574 = ssub.s32 128, 128
          %575 = vsyncadd %s566, %s574
          %s576 = smul.addr %s20, 128
          %s577 = scalar_lea.hbm %s2, %s576
          %s579 = sshll.u32 %s569, 4
          %s580 = int_to_ptr.vmem [resolvable:$true] %s579
          %582 = dma.vmem_to_hbm [thread:$0]  %s580, 128, %s577, %s566
        $region40: #{tpu_custom_call.1} parent=27 // pred_fallthru
          _
      $region28: #{tpu_custom_call.1} parent=5 // pred_fallthru
        _
      %p583 = scmp.le.s32.totalorder 2, %s15
      // Predicated region
      $region41: #{tpu_custom_call.1} parent=5 // pred_check
        %p584 = pneg %p583
      $region42: #{tpu_custom_call.1} parent=5 // pred_check_branch
        %586 = sbr.rel (%p584) target = $region44
      $region43: #{tpu_custom_call.1} parent=5 // pred_region
        %s587 = ssub.s32 %s15, 2
        // Predicated region
        $region45: #{tpu_custom_call.1} parent=43 // pred_check
          %p588 = pneg %p91
        $region46: #{tpu_custom_call.1} parent=43 // pred_check_branch
          %590 = sbr.rel (%p588) target = $region48
        $region47: #{tpu_custom_call.1} parent=43 // pred_region
          %s591 = sand.u32 %s76, 1
          %s592 = scalar_lea.sflag [#allocation4], %s591
          %s593 = sand.u32 %s76, 1
          %s594 = smul.addr %s593, 8
          %s595 = scalar_lea.vmem [#allocation7], %s594
          %596 = dma.done %s592, 128
        $region48: #{tpu_custom_call.1} parent=43 // pred_fallthru
          _
      $region44: #{tpu_custom_call.1} parent=5 // pred_fallthru
        _
    $region6: #{tpu_custom_call.1} parent=1 // loop_footer
      %s19 = sadd.s32 1, %s15
    $region7: #{tpu_custom_call.1} parent=1 // loop_footer_branch
      %14 = sbr.rel target = $region3
    $region8: #{tpu_custom_call.1} parent=1 // loop_exit
      _
    %597 = vsyncpa [#allocation3], 1
    %s598 = scalar_lea.sflag [#allocation3], 1
    %599 = vsyncpa %s598, 1
    %600 = vsyncpa [#allocation6], 1
    %601 = vsyncpa [#allocation4], 1
    %s602 = scalar_lea.sflag [#allocation4], 1
    %603 = vsyncpa %s602, 1

</llo_original>
